<compile_context>
chip_gen: v7x
topology: tpu7x:2x2x1
jax: 0.10.0
libtpu: 0.0.40
codegen_flags: <defaults>
</compile_context>

<pallas_src>
import functools

import jax
import jax.numpy as jnp
from jax.experimental import pallas as pl
from jax.experimental.pallas import tpu as pltpu


def _round_up(n, m):
    return ((n + m - 1) // m) * m


def _cdiv(a, b):
    return -(-a // b)


def _pad_axis(a, axis, target):
    size = a.shape[axis]
    if size == target:
        return a
    widths = [(0, 0)] * a.ndim
    widths[axis] = (0, target - size)
    return jnp.pad(a, widths)


def _vmem_capacity_bytes():
    try:
        return int(pltpu.get_tpu_info().vmem_capacity_bytes)
    except Exception:
        return 64 * 1024 * 1024   # conservative (v7x-sized) fallback


# -----------------------------------------------------------------------------
# Kernel
# -----------------------------------------------------------------------------
def _classblock_kernel(x_ref, w1_ref, b1_ref, w2_ref, b2_ref, out_ref, h_ref, *,
                       use_leaky_relu):
    j = pl.program_id(1)   # class-tile axis (innermost, "arbitrary")

    # ---- add_block: Linear (+folded eval BatchNorm) [+ LeakyReLU(0.1)] ----
    # Computed once per batch tile (class axis is innermost), stored in a
    # persistent VMEM scratch and reused for every class tile.
    @pl.when(j == 0)
    def _():
        # x arrives as f32; cast to bf16 in-kernel for the MXU (f32 accumulate).
        h = jnp.dot(x_ref[...].astype(jnp.bfloat16), w1_ref[...],
                    preferred_element_type=jnp.float32)
        h = h + b1_ref[...]                       # (TB, lin_p) + (1, lin_p)
        if use_leaky_relu:
            h = jnp.where(h >= 0.0, h, 0.1 * h)
        h_ref[...] = h.astype(h_ref.dtype)

    # TODO(synk): Dropout(p=droprate) is identity in eval mode; training-mode
    # stochastic masking is intentionally not emulated here.

    # ---- classifier: Linear(linear -> class_num), one class tile per step ----
    out = jnp.dot(h_ref[...], w2_ref[...], preferred_element_type=jnp.float32)
    out_ref[...] = (out + b2_ref[...]).astype(out_ref.dtype)


# -----------------------------------------------------------------------------
# One-time parameter preparation (BN fold + pad + bf16 cast)
# -----------------------------------------------------------------------------
def prepare_params(params):
    """Fold eval-mode BatchNorm + Linear1 bias into w1/b1, pad lane dims to
    multiples of 128, choose the class-dim tile width, and cast weights to
    bf16.  Do this ONCE and reuse the result for every forward."""
    w1 = params["w1"]            # (input_dim, linear)  == torch W1.T
    b1 = params["b1"]            # (1, linear)
    scale = params["bn_scale"]   # (1, linear) = gamma / sqrt(running_var + eps)
    shift = params["bn_shift"]   # (1, linear) = beta - running_mean * scale
    w2 = params["w2"]            # (linear, class_num) == torch W2.T
    b2 = params["b2"]            # (1, class_num)

    input_dim, linear = w1.shape
    class_num = w2.shape[1]

    # Fold BatchNorm (running stats) and the first bias into the first Linear.
    w1f = w1 * scale
    b1f = b1 * scale + shift

    in_p = _round_up(input_dim, 128)
    lin_p = _round_up(linear, 128)
    cls_p = _round_up(class_num, 128)
    # Class tile: full head if it is small, otherwise 512 lanes (multiple of
    # 256 so v6e/v7x's 2x256 MXU passes stay full); bounds w2 VMEM residency.
    tn = cls_p if cls_p <= 512 else 512
    cls_pp = _round_up(cls_p, tn)

    return {
        "w1": _pad_axis(_pad_axis(w1f, 0, in_p), 1, lin_p).astype(jnp.bfloat16),
        "b1": _pad_axis(b1f, 1, lin_p).astype(jnp.float32),
        "w2": _pad_axis(_pad_axis(w2, 0, lin_p), 1, cls_pp).astype(jnp.bfloat16),
        "b2": _pad_axis(b2, 1, cls_pp).astype(jnp.float32),
        "input_dim": int(input_dim), "linear": int(linear),
        "class_num": int(class_num),
        "in_p": in_p, "lin_p": lin_p, "cls_pp": cls_pp, "tn": tn,
    }


# -----------------------------------------------------------------------------
# Forward
# -----------------------------------------------------------------------------
def class_block_forward(x, prepped, *, relu=False, batch_tile=1024,
                        out_dtype=jnp.float32):
    """Fused ClassBlock forward. x: (B, input_dim) float32 (or bf16)."""
    B, input_dim = x.shape
    assert input_dim == prepped["input_dim"]
    in_p, lin_p = prepped["in_p"], prepped["lin_p"]
    cls_pp, tn = prepped["cls_pp"], prepped["tn"]
    class_num = prepped["class_num"]
    nj = cls_pp // tn

    # ---- VMEM-budget-aware batch tile (per TPU generation) ----
    vmem_cap = _vmem_capacity_bytes()
    budget = min(int(vmem_cap * 0.70), 100 * 1024 * 1024)
    fixed = in_p * lin_p * 2 + lin_p * 4                # w1 (bf16, 1 buf) + b1
    fixed += 2 * (lin_p * tn * 2 + tn * 4)              # w2/b2 tiles, 2 bufs
    per_row = 2 * in_p * 4 + lin_p * 2 + 2 * tn * 4     # x(2 buf) + h + out(2 buf)
    avail = max(budget - fixed, 16 * per_row)
    tb = min(batch_tile, avail // per_row)
    tb = max(16, (tb // 16) * 16)                       # multiples of 16 (bf16 packing)
    tb = min(tb, _round_up(B, 16))

    # >= 2 batch tiles whenever B allows (v7x megacore shards the "parallel"
    # axis across its 2 TensorCores) and rebalance the tile so round_up(B, tb)
    # does not waste up to tb-1 padded rows.
    n_tiles = _cdiv(B, tb)
    if B > 16 and n_tiles < 2:
        n_tiles = 2
    tb = _round_up(_cdiv(B, n_tiles), 16)
    n_tiles = _cdiv(B, tb)
    b_pad = n_tiles * tb

    # x stays in its input dtype (f32); the bf16 cast happens in-kernel.
    x_p = _pad_axis(_pad_axis(x, 1, in_p), 0, b_pad)

    est_use = fixed + tb * per_row + (2 << 20)
    vmem_limit = int(min(vmem_cap, max(budget, est_use) + (8 << 20)))

    kernel = functools.partial(_classblock_kernel, use_leaky_relu=relu)

    # Constant-index weights/bias: single-buffered (index never changes).
    resident = lambda shape: pl.BlockSpec(shape, lambda i, j: (0, 0),
                                          pipeline_mode=pl.Buffered(1))

    out_p = pl.pallas_call(
        kernel,
        out_shape=jax.ShapeDtypeStruct((b_pad, cls_pp), out_dtype),
        grid_spec=pltpu.PrefetchScalarGridSpec(
            num_scalar_prefetch=0,
            grid=(n_tiles, nj),                                   # batch outer, class inner
            in_specs=[
                pl.BlockSpec((tb, in_p), lambda i, j: (i, 0)),    # x tile (pipelined)
                resident((in_p, lin_p)),                          # w1 (1 buf, resident)
                resident((1, lin_p)),                             # b1 (1 buf, resident)
                pl.BlockSpec((lin_p, tn), lambda i, j: (0, j)),   # w2 class tile
                pl.BlockSpec((1, tn), lambda i, j: (0, j)),       # b2 class tile
            ],
            out_specs=pl.BlockSpec((tb, tn), lambda i, j: (i, j)),
            scratch_shapes=[pltpu.VMEM((tb, lin_p), jnp.bfloat16)],  # h, reused over j
        ),
        compiler_params=pltpu.CompilerParams(
            dimension_semantics=("parallel", "arbitrary"),
            vmem_limit_bytes=vmem_limit,
        ),
    )(x_p, prepped["w1"], prepped["b1"], prepped["w2"], prepped["b2"])

    # Slice padded rows/columns back off outside the kernel.
    return out_p[:B, :class_num]


# -----------------------------------------------------------------------------
# Init mirroring weights_init_kaiming / weights_init_classifier, and reference
# -----------------------------------------------------------------------------
def init_params(key, input_dim, linear, class_num):
    k1, k2, k3 = jax.random.split(key, 3)

    # Linear1: kaiming_normal_(a=0, mode='fan_out') -> std = sqrt(2 / fan_out)
    std1 = jnp.sqrt(2.0 / linear)
    w1_t = jax.random.normal(k1, (linear, input_dim), jnp.float32) * std1
    w1 = w1_t.T                                     # (input_dim, linear)
    b1 = jnp.zeros((1, linear), jnp.float32)

    # BatchNorm1d: weight ~ N(1, 0.02), bias = 0, running_mean = 0, running_var = 1
    eps = 1e-5
    gamma = 1.0 + 0.02 * jax.random.normal(k2, (linear,), jnp.float32)
    beta = jnp.zeros((linear,), jnp.float32)
    running_mean = jnp.zeros((linear,), jnp.float32)
    running_var = jnp.ones((linear,), jnp.float32)
    bn_scale = (gamma / jnp.sqrt(running_var + eps)).reshape(1, linear)
    bn_shift = (beta - running_mean * bn_scale[0]).reshape(1, linear)

    # Classifier: normal_(std=0.001), bias = 0
    w2_t = 0.001 * jax.random.normal(k3, (class_num, linear), jnp.float32)
    w2 = w2_t.T                                     # (linear, class_num)
    b2 = jnp.zeros((1, class_num), jnp.float32)

    return {"w1": w1, "b1": b1, "bn_scale": bn_scale, "bn_shift": bn_shift,
            "w2": w2, "b2": b2}


def class_block_reference(x, params, *, relu=False):
    """Pure-JAX f32 reference for correctness checking."""
    h = x @ params["w1"] + params["b1"]
    h = h * params["bn_scale"] + params["bn_shift"]
    if relu:
        h = jnp.where(h >= 0.0, h, 0.1 * h)
    return h @ params["w2"] + params["b2"]


if __name__ == "__main__":
    # Small shapes consistent with the module: a batch of feature vectors.
    # B = 24 (> 16) exercises the two-batch-tile / megacore-split path.
    B, INPUT_DIM, LINEAR, CLASS_NUM = 24, 128, 64, 32

    key = jax.random.PRNGKey(0)
    kx, kp = jax.random.split(key)
    x = jax.random.normal(kx, (B, INPUT_DIM), jnp.float32)
    params = init_params(kp, INPUT_DIM, LINEAR, CLASS_NUM)
    prepped = prepare_params(params)            # one-time weight prep (reused)

    out = jax.block_until_ready(class_block_forward(x, prepped, relu=False))
    ref = class_block_reference(x, params, relu=False)
    assert out.shape == (B, CLASS_NUM)
    # bf16 MXU operands with f32 accumulation -> loosened tolerance vs f32 ref.
    assert jnp.allclose(out, ref, atol=1e-2, rtol=5e-2), "mismatch vs reference"

    # Also exercise the LeakyReLU branch once.
    out_relu = jax.block_until_ready(class_block_forward(x, prepped, relu=True))
    ref_relu = class_block_reference(x, params, relu=True)
    assert jnp.allclose(out_relu, ref_relu, atol=1e-2, rtol=5e-2), "relu mismatch"

    print("KERNEL_OK")
</pallas_src>

<mosaic_0001>
module attributes {stable_mosaic.version = 11 : i64} {
  func.func @_classblock_kernel(%arg0: i32, %arg1: i32, %arg2: memref<16x128xf32, #tpu.memory_space<vmem>>, %arg3: memref<128x128xbf16, #tpu.memory_space<vmem>>, %arg4: memref<1x128xf32, #tpu.memory_space<vmem>>, %arg5: memref<128x128xbf16, #tpu.memory_space<vmem>>, %arg6: memref<1x128xf32, #tpu.memory_space<vmem>>, %arg7: memref<16x128xf32, #tpu.memory_space<vmem>>, %arg8: memref<16x128xbf16, #tpu.memory_space<vmem>>) attributes {dimension_semantics = [#tpu.dimension_semantics<parallel>, #tpu.dimension_semantics<arbitrary>], iteration_bounds = array<i64: 2, 1>, scalar_prefetch = 0 : i64, scratch_operands = 1 : i64, tpu.core_type = #tpu.core_type<tc>, window_params = [{transform_indices = @transform_0, window_bounds = array<i64: 16, 128>}, {pipeline_mode = #tpu.pipeline_mode<synchronous>, transform_indices = @transform_1, window_bounds = array<i64: 128, 128>}, {pipeline_mode = #tpu.pipeline_mode<synchronous>, transform_indices = @transform_2, window_bounds = array<i64: 1, 128>}, {transform_indices = @transform_3, window_bounds = array<i64: 128, 128>}, {transform_indices = @transform_4, window_bounds = array<i64: 1, 128>}, {transform_indices = @transform_5, window_bounds = array<i64: 16, 128>}]} {
    %c0_i32 = arith.constant 0 : i32
    %0 = arith.cmpi eq, %arg1, %c0_i32 : i32
    %1 = arith.extui %0 : i1 to i32
    %c0_i32_0 = arith.constant 0 : i32
    %2 = arith.cmpi ne, %1, %c0_i32_0 : i32
    scf.if %2 {
      %c0_8 = arith.constant 0 : index
      %c0_9 = arith.constant 0 : index
      %10 = vector.load %arg2[%c0_8, %c0_9] : memref<16x128xf32, #tpu.memory_space<vmem>>, vector<16x128xf32>
      %11 = arith.truncf %10 : vector<16x128xf32> to vector<16x128xbf16>
      %c0_10 = arith.constant 0 : index
      %c0_11 = arith.constant 0 : index
      %12 = vector.load %arg3[%c0_10, %c0_11] : memref<128x128xbf16, #tpu.memory_space<vmem>>, vector<128x128xbf16>
      %cst_12 = arith.constant dense<0.000000e+00> : vector<16x128xf32>
      %13 = tpu.matmul %11, %12, %cst_12 {dimension_numbers = #tpu.dot_dimension_numbers<[1], [0], [0], [1], [0, 0, 1, 1], [], []>} : vector<16x128xbf16>, vector<128x128xbf16>, vector<16x128xf32> -> vector<16x128xf32>
      %c0_13 = arith.constant 0 : index
      %c0_14 = arith.constant 0 : index
      %14 = vector.load %arg4[%c0_13, %c0_14] : memref<1x128xf32, #tpu.memory_space<vmem>>, vector<1x128xf32>
      %15 = vector.broadcast %14 : vector<1x128xf32> to vector<16x128xf32>
      %16 = arith.addf %13, %15 : vector<16x128xf32>
      %17 = arith.truncf %16 : vector<16x128xf32> to vector<16x128xbf16>
      %c0_15 = arith.constant 0 : index
      %c0_16 = arith.constant 0 : index
      %18 = vector.load %arg8[%c0_15, %c0_16] : memref<16x128xbf16, #tpu.memory_space<vmem>>, vector<16x128xbf16>
      tpu.vector_store %arg8[%c0_15, %c0_16], %17 {strides = array<i32>} : memref<16x128xbf16, #tpu.memory_space<vmem>>, vector<16x128xbf16>,
    } else {
    }
    %c0 = arith.constant 0 : index
    %c0_1 = arith.constant 0 : index
    %3 = vector.load %arg8[%c0, %c0_1] : memref<16x128xbf16, #tpu.memory_space<vmem>>, vector<16x128xbf16>
    %c0_2 = arith.constant 0 : index
    %c0_3 = arith.constant 0 : index
    %4 = vector.load %arg5[%c0_2, %c0_3] : memref<128x128xbf16, #tpu.memory_space<vmem>>, vector<128x128xbf16>
    %cst = arith.constant dense<0.000000e+00> : vector<16x128xf32>
    %5 = tpu.matmul %3, %4, %cst {dimension_numbers = #tpu.dot_dimension_numbers<[1], [0], [0], [1], [0, 0, 1, 1], [], []>} : vector<16x128xbf16>, vector<128x128xbf16>, vector<16x128xf32> -> vector<16x128xf32>
    %c0_4 = arith.constant 0 : index
    %c0_5 = arith.constant 0 : index
    %6 = vector.load %arg6[%c0_4, %c0_5] : memref<1x128xf32, #tpu.memory_space<vmem>>, vector<1x128xf32>
    %7 = vector.broadcast %6 : vector<1x128xf32> to vector<16x128xf32>
    %8 = arith.addf %5, %7 : vector<16x128xf32>
    %c0_6 = arith.constant 0 : index
    %c0_7 = arith.constant 0 : index
    %9 = vector.load %arg7[%c0_6, %c0_7] : memref<16x128xf32, #tpu.memory_space<vmem>>, vector<16x128xf32>
    tpu.vector_store %arg7[%c0_6, %c0_7], %8 {strides = array<i32>} : memref<16x128xf32, #tpu.memory_space<vmem>>, vector<16x128xf32>,
    return
  }
  func.func @transform_0(%arg0: i32, %arg1: i32) -> (i32, i32) {
    %c0_i32 = arith.constant 0 : i32
    %c0_i32_0 = arith.constant 0 : i32
    return %arg0, %c0_i32 : i32, i32
  }
  func.func @transform_1(%arg0: i32, %arg1: i32) -> (i32, i32) {
    %c0_i32 = arith.constant 0 : i32
    %c0_i32_0 = arith.constant 0 : i32
    %c0_i32_1 = arith.constant 0 : i32
    return %c0_i32, %c0_i32_0 : i32, i32
  }
  func.func @transform_2(%arg0: i32, %arg1: i32) -> (i32, i32) {
    %c0_i32 = arith.constant 0 : i32
    %c0_i32_0 = arith.constant 0 : i32
    %c0_i32_1 = arith.constant 0 : i32
    return %c0_i32, %c0_i32_0 : i32, i32
  }
  func.func @transform_3(%arg0: i32, %arg1: i32) -> (i32, i32) {
    %c0_i32 = arith.constant 0 : i32
    %c0_i32_0 = arith.constant 0 : i32
    return %c0_i32, %arg1 : i32, i32
  }
  func.func @transform_4(%arg0: i32, %arg1: i32) -> (i32, i32) {
    %c0_i32 = arith.constant 0 : i32
    %c0_i32_0 = arith.constant 0 : i32
    return %c0_i32, %arg1 : i32, i32
  }
  func.func @transform_5(%arg0: i32, %arg1: i32) -> (i32, i32) {
    %c0_i32 = arith.constant 0 : i32
    return %arg0, %arg1 : i32, i32
  }
}

</mosaic_0001>

<llo_original>
// kernel: tpu_custom_call.1
$region0: #{tpu_custom_call.1}
  #allocation0 [shape = 'u32[]', space=smem, size = 0x4, offset = 0x4, fixed_abs, tag = 'smem constant byte address 0x4 - core index']
  #allocation1 [shape = 'u32[144,128]{1,0:T(1,128)}', space=vmem, size = 0x12000, scoped, tag = 'internal scratch']
  #allocation2 [shape = 'bf16[16,128]{1,0:T(16,128)(2,1)}', space=vmem, size = 0x1000, scoped, tag = 'scratch operand']
  %s0 = inlined_call_operand.hbm [shape: f32[32,128], index: 0, kind: input, shape index: {}]
  %s1 = inlined_call_operand.hbm [shape: bf16[128,128], index: 1, kind: input, shape index: {}]
  %s2 = inlined_call_operand.vmem [shape: f32[1,128], index: 2, kind: input, shape index: {}]
  %s3 = inlined_call_operand.hbm [shape: bf16[128,128], index: 3, kind: input, shape index: {}]
  %s4 = inlined_call_operand.vmem [shape: f32[1,128], index: 4, kind: input, shape index: {}]
  %s5 = inlined_call_operand.hbm [shape: f32[32,128], index: 5, kind: output, shape index: {}]
  %s6 = sld [smem:[#allocation0]]
  $region69: #{tpu_custom_call.1} parent=0
    _
  %s8 = ssub.s32 1, %s6
  %s9 = scalar_select 0, %s8, %s6
  $region1: #{tpu_custom_call.1} parent=0
    #allocation3 [shape = 'u8[16384]{0}', space=vmem, size = 0x4000, scoped, tag = 'input window, operand 0']
    #allocation4 [shape = 's32[2]{0}', space=sflag, size = 0x8, scoped, tag = 'scoped memory for tpu_custom_call.1']
    #allocation5 [shape = 's32[2]{0}', space=sflag, size = 0x8, scoped, tag = 'scoped memory for tpu_custom_call.1']
    #allocation6 [shape = 'u8[32768]{0}', space=vmem, size = 0x8000, scoped, tag = 'input window, operand 1, single buffered']
    #allocation7 [shape = 's32[1]{0}', space=sflag, size = 0x4, scoped, tag = 'scoped memory for tpu_custom_call.1']
    #allocation8 [shape = 'u8[32768]{0}', space=vmem, size = 0x8000, scoped, tag = 'input window, operand 3, single buffered']
    #allocation9 [shape = 'u8[16384]{0}', space=vmem, size = 0x4000, scoped, tag = 'output window, operand 0']
    %10 = vsyncpa [#allocation4], 0
    %s11 = scalar_lea.sflag [#allocation4], 1
    %12 = vsyncpa %s11, 0
    %13 = vsyncpa [#allocation7], 0
    %14 = vsyncpa [#allocation5], 0
    %s15 = scalar_lea.sflag [#allocation5], 1
    %16 = vsyncpa %s15, 0
    loop: start=0, step=1, limit=4
    $region2: #{tpu_custom_call.1} parent=1 // loop_pre_header
      _
    $region3: #{tpu_custom_call.1} parent=1 // loop_header
      %s18 = sphi 0, %s22
      %p19 = scmp.ge.s32.totalorder %s18, 4
      %s25 = sphi 0, %s37
      %s26 = sphi 0, %s33
      %s27 = sphi 0, %s25
      %s28 = sphi 0, %s26
      %s29 = sphi 0, %s27
      %s30 = sphi 0, %s28
      %s40 = sphi 0, %s42
      %s43 = sphi 0, %s40
      %s44 = sphi 0, %s43
      %s60 = sphi 0, %s44
      %s64 = sphi 0, %s64
      %s66 = sphi 0, %s64
      %s67 = sphi 0, %s66
      %s81 = sphi 0, %s67
      %s85 = sphi 0, %s85
      %s87 = sphi 0, %s85
      %s88 = sphi 0, %s87
      %s102 = sphi 0, %s88
      %s108 = sphi 0, %s110
      %s111 = sphi 0, %s108
      %s112 = sphi 0, %s111
      %s128 = sphi 0, %s112
      %s134 = sphi 0, %s136
      %s137 = sphi 0, %s134
      %s138 = sphi 0, %s137
      %s154 = sphi 0, %s138
      %s162 = sphi 0, %s164
      %s165 = sphi 0, %s162
      %s166 = sphi 0, %s165
      %s182 = sphi 0, %s166
    $region4: #{tpu_custom_call.1} parent=1 // loop_header_branch
      %21 = sbr.rel (%p19) target = $region8
    $region5: #{tpu_custom_call.1} parent=1 // loop_body
      %s23 = ssub.s32 %s18, 1
      %s24 = ssub.s32 %s18, 2
      %s31 = sadd.s32 1, %s26
      %p32 = scmp.ge.s32.totalorder %s31, 1
      %s33 = scalar_select %p32, 0, %s31
      %s34 = sadd.s32 1, %s25
      %s35 = scalar_select %p32, %s34, %s25
      %p36 = scmp.ge.s32.totalorder %s35, 2
      %s37 = scalar_select %p36, 0, %s35
      %s38 = ssub.s32 %s25, %s37
      %p39 = scmp.eq.s32.totalorder %s38, 0
      %s41 = sadd.s32 %s40, 1
      %s42 = scalar_select %p39, %s40, %s41
      %p45 = pneg %p39
      %p46 = scmp.eq.s32.totalorder %s18, 1
      %p47 = por %p45, %p46
      %p48 = scmp.ne.s32.totalorder %s40, %s43
      %p49 = scmp.eq.s32.totalorder %s18, 0
      %p50 = por %p48, %p49
      %p51 = scmp.ne.s32.totalorder %s40, %s43
      %p52 = scmp.eq.s32.totalorder %s23, 1
      %p53 = por %p51, %p52
      %p54 = scmp.ne.s32.totalorder %s43, %s44
      %p55 = scmp.eq.s32.totalorder %s23, 0
      %p56 = por %p54, %p55
      %p57 = scmp.ne.s32.totalorder %s43, %s44
      %p58 = scmp.eq.s32.totalorder %s24, 1
      %p59 = por %p57, %p58
      %p61 = scmp.ne.s32.totalorder %s44, %s60
      %p62 = scmp.eq.s32.totalorder %s24, 0
      %p63 = por %p61, %p62
      %s65 = sadd.s32 %s64, 1
      %p68 = scmp.eq.s32.totalorder %s18, 1
      %p69 = scmp.ne.s32.totalorder %s64, %s66
      %p70 = scmp.eq.s32.totalorder %s18, 0
      %p71 = por %p69, %p70
      %p72 = scmp.ne.s32.totalorder %s64, %s66
      %p73 = scmp.eq.s32.totalorder %s23, 1
      %p74 = por %p72, %p73
      %p75 = scmp.ne.s32.totalorder %s66, %s67
      %p76 = scmp.eq.s32.totalorder %s23, 0
      %p77 = por %p75, %p76
      %p78 = scmp.ne.s32.totalorder %s66, %s67
      %p79 = scmp.eq.s32.totalorder %s24, 1
      %p80 = por %p78, %p79
      %p82 = scmp.ne.s32.totalorder %s67, %s81
      %p83 = scmp.eq.s32.totalorder %s24, 0
      %p84 = por %p82, %p83
      %s86 = sadd.s32 %s85, 1
      %p89 = scmp.eq.s32.totalorder %s18, 1
      %p90 = scmp.ne.s32.totalorder %s85, %s87
      %p91 = scmp.eq.s32.totalorder %s18, 0
      %p92 = por %p90, %p91
      %p93 = scmp.ne.s32.totalorder %s85, %s87
      %p94 = scmp.eq.s32.totalorder %s23, 1
      %p95 = por %p93, %p94
      %p96 = scmp.ne.s32.totalorder %s87, %s88
      %p97 = scmp.eq.s32.totalorder %s23, 0
      %p98 = por %p96, %p97
      %p99 = scmp.ne.s32.totalorder %s87, %s88
      %p100 = scmp.eq.s32.totalorder %s24, 1
      %p101 = por %p99, %p100
      %p103 = scmp.ne.s32.totalorder %s88, %s102
      %p104 = scmp.eq.s32.totalorder %s24, 0
      %p105 = por %p103, %p104
      %s106 = ssub.s32 %s26, %s33
      %p107 = scmp.eq.s32.totalorder %s106, 0
      %s109 = sadd.s32 %s108, 1
      %s110 = scalar_select %p107, %s108, %s109
      %p113 = pneg %p107
      %p114 = scmp.eq.s32.totalorder %s18, 1
      %p115 = por %p113, %p114
      %p116 = scmp.ne.s32.totalorder %s108, %s111
      %p117 = scmp.eq.s32.totalorder %s18, 0
      %p118 = por %p116, %p117
      %p119 = scmp.ne.s32.totalorder %s108, %s111
      %p120 = scmp.eq.s32.totalorder %s23, 1
      %p121 = por %p119, %p120
      %p122 = scmp.ne.s32.totalorder %s111, %s112
      %p123 = scmp.eq.s32.totalorder %s23, 0
      %p124 = por %p122, %p123
      %p125 = scmp.ne.s32.totalorder %s111, %s112
      %p126 = scmp.eq.s32.totalorder %s24, 1
      %p127 = por %p125, %p126
      %p129 = scmp.ne.s32.totalorder %s112, %s128
      %p130 = scmp.eq.s32.totalorder %s24, 0
      %p131 = por %p129, %p130
      %s132 = ssub.s32 %s26, %s33
      %p133 = scmp.eq.s32.totalorder %s132, 0
      %s135 = sadd.s32 %s134, 1
      %s136 = scalar_select %p133, %s134, %s135
      %p139 = pneg %p133
      %p140 = scmp.eq.s32.totalorder %s18, 1
      %p141 = por %p139, %p140
      %p142 = scmp.ne.s32.totalorder %s134, %s137
      %p143 = scmp.eq.s32.totalorder %s18, 0
      %p144 = por %p142, %p143
      %p145 = scmp.ne.s32.totalorder %s134, %s137
      %p146 = scmp.eq.s32.totalorder %s23, 1
      %p147 = por %p145, %p146
      %p148 = scmp.ne.s32.totalorder %s137, %s138
      %p149 = scmp.eq.s32.totalorder %s23, 0
      %p150 = por %p148, %p149
      %p151 = scmp.ne.s32.totalorder %s137, %s138
      %p152 = scmp.eq.s32.totalorder %s24, 1
      %p153 = por %p151, %p152
      %p155 = scmp.ne.s32.totalorder %s138, %s154
      %p156 = scmp.eq.s32.totalorder %s24, 0
      %p157 = por %p155, %p156
      %s158 = ssub.s32 %s25, %s37
      %s159 = ssub.s32 %s26, %s33
      %s160 = sor.u32 %s158, %s159
      %p161 = scmp.eq.s32.totalorder %s160, 0
      %s163 = sadd.s32 %s162, 1
      %s164 = scalar_select %p161, %s162, %s163
      %p167 = pneg %p161
      %p168 = scmp.eq.s32.totalorder %s18, 1
      %p169 = por %p167, %p168
      %p170 = scmp.ne.s32.totalorder %s162, %s165
      %p171 = scmp.eq.s32.totalorder %s18, 0
      %p172 = por %p170, %p171
      %p173 = scmp.ne.s32.totalorder %s162, %s165
      %p174 = scmp.eq.s32.totalorder %s23, 1
      %p175 = por %p173, %p174
      %p176 = scmp.ne.s32.totalorder %s165, %s166
      %p177 = scmp.eq.s32.totalorder %s23, 0
      %p178 = por %p176, %p177
      %p179 = scmp.ne.s32.totalorder %s165, %s166
      %p180 = scmp.eq.s32.totalorder %s24, 1
      %p181 = por %p179, %p180
      %p183 = scmp.ne.s32.totalorder %s166, %s182
      %p184 = scmp.eq.s32.totalorder %s24, 0
      %p185 = por %p183, %p184
      %p186 = scmp.le.s32.totalorder 1, %s18
      %p187 = scmp.lt.s32.totalorder %s18, 3
      %p188 = pnand %p186, %p187
      %p189 = pneg %p188
      // Predicated region
      $region9: #{tpu_custom_call.1} parent=5 // pred_check
        _
      $region10: #{tpu_custom_call.1} parent=5 // pred_check_branch
        %191 = sbr.rel (%p188) target = $region12
      $region11: #{tpu_custom_call.1} parent=5 // pred_region
        %s192 = ssub.s32 %s18, 1
        // Predicated region
        $region13: #{tpu_custom_call.1} parent=11 // pred_check
          %p193 = pneg %p77
        $region14: #{tpu_custom_call.1} parent=11 // pred_check_branch
          %195 = sbr.rel (%p193) target = $region16
        $region15: #{tpu_custom_call.1} parent=11 // pred_region
          %s197 = ssub.s32 1024, 1024
          %198 = vsyncadd [#allocation7], %s197
          %s199 = sshll.u32 [#allocation6], 4
          %s200 = int_to_ptr.vmem [resolvable:$true] %s199
          %205 = dma.hbm_to_vmem [thread:$0]  %s1, 1024, %s200, [#allocation7], 64, 64, 4
        $region16: #{tpu_custom_call.1} parent=11 // pred_fallthru
          _
        // Predicated region
        $region17: #{tpu_custom_call.1} parent=11 // pred_check
          %p206 = pneg %p98
        $region18: #{tpu_custom_call.1} parent=11 // pred_check_branch
          %208 = sbr.rel (%p206) target = $region20
        $region19: #{tpu_custom_call.1} parent=11 // pred_region
          _
        $region20: #{tpu_custom_call.1} parent=11 // pred_fallthru
          _
        // Predicated region
        $region21: #{tpu_custom_call.1} parent=11 // pred_check
          %p209 = pneg %p124
        $region22: #{tpu_custom_call.1} parent=11 // pred_check_branch
          %211 = sbr.rel (%p209) target = $region24
        $region23: #{tpu_custom_call.1} parent=11 // pred_region
          %s213 = ssub.s32 1024, 1024
          %214 = vsyncadd [#allocation7], %s213
          %s215 = smul.addr %s28, 64
          %s216 = scalar_lea.hbm %s3, %s215
          %s217 = sshll.u32 [#allocation8], 4
          %s218 = int_to_ptr.vmem [resolvable:$true] %s217
          %223 = dma.hbm_to_vmem [thread:$0]  %s216, 1024, %s218, [#allocation7], 64, 64, 4
        $region24: #{tpu_custom_call.1} parent=11 // pred_fallthru
          _
        // Predicated region
        $region25: #{tpu_custom_call.1} parent=11 // pred_check
          %p224 = pneg %p150
        $region26: #{tpu_custom_call.1} parent=11 // pred_check_branch
          %226 = sbr.rel (%p224) target = $region28
        $region27: #{tpu_custom_call.1} parent=11 // pred_region
          %p227 = scmp.lt.s32.totalorder %s28, 0
          %s228 = scalar_select %p227, %s28, 0
          %s229 = scalar_lea.vmem %s4, %s228
        $region28: #{tpu_custom_call.1} parent=11 // pred_fallthru
          _
      $region12: #{tpu_custom_call.1} parent=5 // pred_fallthru
        _
      %p230 = scmp.lt.s32.totalorder %s18, 2
      // Predicated region
      $region29: #{tpu_custom_call.1} parent=5 // pred_check
        %p231 = pneg %p230
      $region30: #{tpu_custom_call.1} parent=5 // pred_check_branch
        %233 = sbr.rel (%p231) target = $region32
      $region31: #{tpu_custom_call.1} parent=5 // pred_region
        // Predicated region
        $region33: #{tpu_custom_call.1} parent=31 // pred_check
          %p234 = pneg %p50
        $region34: #{tpu_custom_call.1} parent=31 // pred_check_branch
          %236 = sbr.rel (%p234) target = $region36
        $region35: #{tpu_custom_call.1} parent=31 // pred_region
          %s237 = sand.u32 %s40, 1
          %s238 = scalar_lea.sflag [#allocation4], %s237
          %s239 = sand.u32 %s40, 1
          %s240 = smul.addr %s239, 16
          %s241 = scalar_lea.vmem [#allocation3], %s240
          %s242 = smul.u32 2, %s25
          %s244 = ssub.s32 256, 256
          %245 = vsyncadd %s238, %s244
          %s246 = smul.addr %s242, 128
          %s247 = scalar_lea.hbm %s0, %s246
          %s248 = sshll.u32 %s241, 4
          %s249 = int_to_ptr.vmem [resolvable:$true] %s248
          %254 = dma.hbm_to_vmem [thread:$0]  %s247, 256, %s249, %s238, 128, 128, 8
        $region36: #{tpu_custom_call.1} parent=31 // pred_fallthru
          _
      $region32: #{tpu_custom_call.1} parent=5 // pred_fallthru
        _
      %p255 = scmp.le.s32.totalorder 1, %s18
      %p256 = scmp.lt.s32.totalorder %s18, 3
      %p257 = pnand %p255, %p256
      %p258 = pneg %p257
      // Predicated region
      $region37: #{tpu_custom_call.1} parent=5 // pred_check
        _
      $region38: #{tpu_custom_call.1} parent=5 // pred_check_branch
        %260 = sbr.rel (%p257) target = $region40
      $region39: #{tpu_custom_call.1} parent=5 // pred_region
        %s261 = ssub.s32 %s18, 1
        %s262 = sand.u32 %s43, 1
        %s263 = scalar_lea.sflag [#allocation4], %s262
        %s264 = sand.u32 %s43, 1
        %s265 = smul.addr %s264, 16
        %s266 = scalar_lea.vmem [#allocation3], %s265
        // Predicated region
        $region41: #{tpu_custom_call.1} parent=39 // pred_check
          %p267 = pneg %p56
        $region42: #{tpu_custom_call.1} parent=39 // pred_check_branch
          %269 = sbr.rel (%p267) target = $region44
        $region43: #{tpu_custom_call.1} parent=39 // pred_region
          %270 = dma.done %s263, 256
        $region44: #{tpu_custom_call.1} parent=39 // pred_fallthru
          _
        // Predicated region
        $region45: #{tpu_custom_call.1} parent=39 // pred_check
          %p271 = pneg %p77
        $region46: #{tpu_custom_call.1} parent=39 // pred_check_branch
          %273 = sbr.rel (%p271) target = $region48
        $region47: #{tpu_custom_call.1} parent=39 // pred_region
          %274 = dma.done [#allocation7], 1024
        $region48: #{tpu_custom_call.1} parent=39 // pred_fallthru
          _
        // Predicated region
        $region49: #{tpu_custom_call.1} parent=39 // pred_check
          %p275 = pneg %p124
        $region50: #{tpu_custom_call.1} parent=39 // pred_check_branch
          %277 = sbr.rel (%p275) target = $region52
        $region51: #{tpu_custom_call.1} parent=39 // pred_region
          %278 = dma.done [#allocation7], 1024
        $region52: #{tpu_custom_call.1} parent=39 // pred_fallthru
          _
        %s279 = sand.u32 %s43, 1
        %s280 = scalar_lea.sflag [#allocation4], %s279
        %s281 = sand.u32 %s43, 1
        %s282 = smul.addr %s281, 16
        %s283 = scalar_lea.vmem [#allocation3], %s282
        %p284 = pneg %p56
        %p285 = pneg %p53
        %p286 = pneg %p77
        %p287 = pneg %p74
        %p288 = pneg %p98
        %p289 = pneg %p95
        %p290 = pneg %p124
        %p291 = pneg %p121
        %p292 = scmp.lt.s32.totalorder %s28, 0
        %s293 = scalar_select %p292, %s28, 0
        %s294 = scalar_lea.vmem %s4, %s293
        %p295 = pneg %p150
        %p296 = pneg %p147
        %p297 = pneg %p178
        %p298 = pneg %p175
        %s299 = sand.u32 %s165, 1
        %s300 = scalar_lea.sflag [#allocation5], %s299
        %s301 = sand.u32 %s165, 1
        %s302 = smul.addr %s301, 16
        %s303 = scalar_lea.vmem [#allocation9], %s302
        %s304 = smul.u32 2, %s27
        %p305 = scmp.lt.s32.totalorder %s28, 0
        %s306 = scalar_select %p305, %s28, 0
        %s307 = scalar_lea.vmem %s4, %s306
        %s308 = smul.u32 2, %s27
        %p310 = scmp.eq.s32.totalorder %s28, 0
        // Predicated region
        $region53: #{tpu_custom_call.1} parent=39 // pred_check
          %p311 = pneg %p310
        $region54: #{tpu_custom_call.1} parent=39 // pred_check_branch
          %313 = sbr.rel (%p311) target = $region56
        $region55: #{tpu_custom_call.1} parent=39 // pred_region
          %v314 = vld [vmem:[%s266] sm:$0xff]
          %v315 = vld [vmem:[%s266 + $0x8] sm:$0xff]
          %v316 = vpack.c.bf16 %v315, %v314
          %v317 = vld [vmem:[#allocation6] sm:$0xf]
          %v318 = vld [vmem:[#allocation6 + $0x4] sm:$0xf]
          %v319 = vld [vmem:[#allocation6 + $0x8] sm:$0xf]
          %v320 = vld [vmem:[#allocation6 + $0xc] sm:$0xf]
          %v321 = vld [vmem:[#allocation6 + $0x10] sm:$0xf]
          %v322 = vld [vmem:[#allocation6 + $0x14] sm:$0xf]
          %v323 = vld [vmem:[#allocation6 + $0x18] sm:$0xf]
          %v324 = vld [vmem:[#allocation6 + $0x1c] sm:$0xf]
          %v325 = vld [vmem:[#allocation6 + $0x20] sm:$0xf]
          %v326 = vld [vmem:[#allocation6 + $0x24] sm:$0xf]
          %v327 = vld [vmem:[#allocation6 + $0x28] sm:$0xf]
          %v328 = vld [vmem:[#allocation6 + $0x2c] sm:$0xf]
          %v329 = vld [vmem:[#allocation6 + $0x30] sm:$0xf]
          %v330 = vld [vmem:[#allocation6 + $0x34] sm:$0xf]
          %v331 = vld [vmem:[#allocation6 + $0x38] sm:$0xf]
          %v332 = vld [vmem:[#allocation6 + $0x3c] sm:$0xf]
          %v333 = vld [vmem:[%s2] sm:$0x1]
          %v335 = vlaneseq
          %v336 = vshrl.u32 %v335, 7
          %v337 = vsub.s32 0, %v336
          %v338 = vrot.slane %v333, %v337
          %v356 = vunpack.c.l.b16 %v317
          %v357 = vunpack.c.l.b16 %v318
          %v358 = vunpack.c.l.b16 %v319
          %v359 = vunpack.c.l.b16 %v320
          %v360 = vunpack.c.l.b16 %v321
          %v361 = vunpack.c.l.b16 %v322
          %v362 = vunpack.c.l.b16 %v323
          %v363 = vunpack.c.l.b16 %v324
          %v364 = vunpack.c.l.b16 %v325
          %v365 = vunpack.c.l.b16 %v326
          %v366 = vunpack.c.l.b16 %v327
          %v367 = vunpack.c.l.b16 %v328
          %v368 = vunpack.c.l.b16 %v329
          %v369 = vunpack.c.l.b16 %v330
          %v370 = vunpack.c.l.b16 %v331
          %v371 = vunpack.c.l.b16 %v332
          %v372 = vpack.c.b16 %v357, %v356
          %v373 = vpack.c.b16 %v359, %v358
          %v374 = vpack.c.b16 %v361, %v360
          %v375 = vpack.c.b16 %v363, %v362
          %v376 = vpack.c.b16 %v365, %v364
          %v377 = vpack.c.b16 %v367, %v366
          %v378 = vpack.c.b16 %v369, %v368
          %v379 = vpack.c.b16 %v371, %v370
          %388 = vmatprep.subr.bf16.mxu0 0
          %389 = vmatpush1.bf16.msra.mxu0 %v372
          %390 = vmatprep.subr.bf16.mxu0 0
          %391 = vmatpush1.bf16.msra.mxu0 %v373
          %392 = vmatprep.subr.bf16.mxu0 0
          %393 = vmatpush1.bf16.msra.mxu0 %v374
          %394 = vmatprep.subr.bf16.mxu0 0
          %395 = vmatpush1.bf16.msra.mxu0 %v375
          %396 = vmatprep.subr.bf16.mxu0 0
          %397 = vmatpush1.bf16.msra.mxu0 %v376
          %398 = vmatprep.subr.bf16.mxu0 0
          %399 = vmatpush1.bf16.msra.mxu0 %v377
          %400 = vmatprep.subr.bf16.mxu0 0
          %401 = vmatpush1.bf16.msra.mxu0 %v378
          %402 = vmatprep.subr.bf16.mxu0 0
          %403 = vmatpush1.bf16.msra.mxu0 %v379
          %404 = vmatprep.subr.bf16.mxu0 0
          %405 = vmatpush1.bf16.msra.mxu0 0
          %406 = vmatprep.subr.bf16.mxu0 0
          %407 = vmatpush1.bf16.msra.mxu0 0
          %408 = vmatprep.subr.bf16.mxu0 0
          %409 = vmatpush1.bf16.msra.mxu0 0
          %410 = vmatprep.subr.bf16.mxu0 0
          %411 = vmatpush1.bf16.msra.mxu0 0
          %412 = vmatprep.subr.bf16.mxu0 0
          %413 = vmatpush1.bf16.msra.mxu0 0
          %414 = vmatprep.subr.bf16.mxu0 0
          %415 = vmatpush1.bf16.msra.mxu0 0
          %416 = vmatprep.subr.bf16.mxu0 0
          %417 = vmatpush1.bf16.msra.mxu0 0
          %418 = vmatprep.subr.bf16.mxu0 0
          %419 = vmatpush1.bf16.msra.mxu0 0
          %420 = vmatprep.mubr.bf16.mxu0 0
          %421 = vmatmul.mubr.bf16.gmra.mrb[0].mxu0 %v316
          %v422 = vpop.f32.mrb[0].mxu0
          %v423 = vadd.f32 %v338, %v422
          %v424 = vpop.f32.mrb[0].mxu0
          %v425 = vpop.f32.mrb[0].mxu0
          %v426 = vadd.f32 %v338, %v425
          %v427 = vpop.f32.mrb[0].mxu0
          %428 = vdwg.mxu0
          %v429 = vpack.c.bf16 %v426, %v423
          %430 = vst [vmem:[#allocation2] sm:$0xff] %v429
        $region56: #{tpu_custom_call.1} parent=39 // pred_fallthru
          _
        %v431 = vld [vmem:[#allocation2] sm:$0xff]
        %v432 = vld [vmem:[#allocation8] sm:$0xf]
        %v433 = vld [vmem:[#allocation8 + $0x4] sm:$0xf]
        %v434 = vld [vmem:[#allocation8 + $0x8] sm:$0xf]
        %v435 = vld [vmem:[#allocation8 + $0xc] sm:$0xf]
        %v436 = vld [vmem:[#allocation8 + $0x10] sm:$0xf]
        %v437 = vld [vmem:[#allocation8 + $0x14] sm:$0xf]
        %v438 = vld [vmem:[#allocation8 + $0x18] sm:$0xf]
        %v439 = vld [vmem:[#allocation8 + $0x1c] sm:$0xf]
        %v440 = vld [vmem:[#allocation8 + $0x20] sm:$0xf]
        %v441 = vld [vmem:[#allocation8 + $0x24] sm:$0xf]
        %v442 = vld [vmem:[#allocation8 + $0x28] sm:$0xf]
        %v443 = vld [vmem:[#allocation8 + $0x2c] sm:$0xf]
        %v444 = vld [vmem:[#allocation8 + $0x30] sm:$0xf]
        %v445 = vld [vmem:[#allocation8 + $0x34] sm:$0xf]
        %v446 = vld [vmem:[#allocation8 + $0x38] sm:$0xf]
        %v447 = vld [vmem:[#allocation8 + $0x3c] sm:$0xf]
        %v448 = vld [vmem:[%s307] sm:$0x1]
        %v450 = vlaneseq
        %v451 = vshrl.u32 %v450, 7
        %v452 = vsub.s32 0, %v451
        %v453 = vrot.slane %v448, %v452
        %v471 = vunpack.c.l.b16 %v432
        %v472 = vunpack.c.l.b16 %v433
        %v473 = vunpack.c.l.b16 %v434
        %v474 = vunpack.c.l.b16 %v435
        %v475 = vunpack.c.l.b16 %v436
        %v476 = vunpack.c.l.b16 %v437
        %v477 = vunpack.c.l.b16 %v438
        %v478 = vunpack.c.l.b16 %v439
        %v479 = vunpack.c.l.b16 %v440
        %v480 = vunpack.c.l.b16 %v441
        %v481 = vunpack.c.l.b16 %v442
        %v482 = vunpack.c.l.b16 %v443
        %v483 = vunpack.c.l.b16 %v444
        %v484 = vunpack.c.l.b16 %v445
        %v485 = vunpack.c.l.b16 %v446
        %v486 = vunpack.c.l.b16 %v447
        %v487 = vpack.c.b16 %v472, %v471
        %v488 = vpack.c.b16 %v474, %v473
        %v489 = vpack.c.b16 %v476, %v475
        %v490 = vpack.c.b16 %v478, %v477
        %v491 = vpack.c.b16 %v480, %v479
        %v492 = vpack.c.b16 %v482, %v481
        %v493 = vpack.c.b16 %v484, %v483
        %v494 = vpack.c.b16 %v486, %v485
        %503 = vmatprep.subr.bf16.mxu0 0
        %504 = vmatpush1.bf16.msra.mxu0 %v487
        %505 = vmatprep.subr.bf16.mxu0 0
        %506 = vmatpush1.bf16.msra.mxu0 %v488
        %507 = vmatprep.subr.bf16.mxu0 0
        %508 = vmatpush1.bf16.msra.mxu0 %v489
        %509 = vmatprep.subr.bf16.mxu0 0
        %510 = vmatpush1.bf16.msra.mxu0 %v490
        %511 = vmatprep.subr.bf16.mxu0 0
        %512 = vmatpush1.bf16.msra.mxu0 %v491
        %513 = vmatprep.subr.bf16.mxu0 0
        %514 = vmatpush1.bf16.msra.mxu0 %v492
        %515 = vmatprep.subr.bf16.mxu0 0
        %516 = vmatpush1.bf16.msra.mxu0 %v493
        %517 = vmatprep.subr.bf16.mxu0 0
        %518 = vmatpush1.bf16.msra.mxu0 %v494
        %519 = vmatprep.subr.bf16.mxu0 0
        %520 = vmatpush1.bf16.msra.mxu0 0
        %521 = vmatprep.subr.bf16.mxu0 0
        %522 = vmatpush1.bf16.msra.mxu0 0
        %523 = vmatprep.subr.bf16.mxu0 0
        %524 = vmatpush1.bf16.msra.mxu0 0
        %525 = vmatprep.subr.bf16.mxu0 0
        %526 = vmatpush1.bf16.msra.mxu0 0
        %527 = vmatprep.subr.bf16.mxu0 0
        %528 = vmatpush1.bf16.msra.mxu0 0
        %529 = vmatprep.subr.bf16.mxu0 0
        %530 = vmatpush1.bf16.msra.mxu0 0
        %531 = vmatprep.subr.bf16.mxu0 0
        %532 = vmatpush1.bf16.msra.mxu0 0
        %533 = vmatprep.subr.bf16.mxu0 0
        %534 = vmatpush1.bf16.msra.mxu0 0
        %535 = vmatprep.mubr.bf16.mxu0 0
        %536 = vmatmul.mubr.bf16.gmra.mrb[0].mxu0 %v431
        %v537 = vpop.f32.mrb[0].mxu0
        %v538 = vadd.f32 %v453, %v537
        %v539 = vpop.f32.mrb[0].mxu0
        %v540 = vpop.f32.mrb[0].mxu0
        %v541 = vadd.f32 %v453, %v540
        %v542 = vpop.f32.mrb[0].mxu0
        %543 = vdwg.mxu0
        %544 = vst [vmem:[%s303] sm:$0xff] %v538
        %545 = vst [vmem:[%s303 + $0x8] sm:$0xff] %v541
        %s546 = sand.u32 %s165, 1
        %s547 = scalar_lea.sflag [#allocation5], %s546
        %s548 = sand.u32 %s165, 1
        %s549 = smul.addr %s548, 16
        %s550 = scalar_lea.vmem [#allocation9], %s549
        // Predicated region
        $region57: #{tpu_custom_call.1} parent=39 // pred_check
          %p551 = pneg %p175
        $region58: #{tpu_custom_call.1} parent=39 // pred_check_branch
          %553 = sbr.rel (%p551) target = $region60
        $region59: #{tpu_custom_call.1} parent=39 // pred_region
          %s554 = smul.u32 2, %s27
          %s556 = ssub.s32 256, 256
          %557 = vsyncadd %s547, %s556
          %s558 = sadd.s32 %s28, %s554
          %s559 = smul.addr %s558, 128
          %s560 = scalar_lea.hbm %s5, %s559
          %s561 = sshll.u32 %s550, 4
          %s562 = int_to_ptr.vmem [resolvable:$true] %s561
          %567 = dma.vmem_to_hbm [thread:$0]  %s562, 256, %s560, %s547, 128, 128, 8
        $region60: #{tpu_custom_call.1} parent=39 // pred_fallthru
          _
      $region40: #{tpu_custom_call.1} parent=5 // pred_fallthru
        _
      %p568 = scmp.le.s32.totalorder 2, %s18
      // Predicated region
      $region61: #{tpu_custom_call.1} parent=5 // pred_check
        %p569 = pneg %p568
      $region62: #{tpu_custom_call.1} parent=5 // pred_check_branch
        %571 = sbr.rel (%p569) target = $region64
      $region63: #{tpu_custom_call.1} parent=5 // pred_region
        %s572 = ssub.s32 %s18, 2
        // Predicated region
        $region65: #{tpu_custom_call.1} parent=63 // pred_check
          %p573 = pneg %p181
        $region66: #{tpu_custom_call.1} parent=63 // pred_check_branch
          %575 = sbr.rel (%p573) target = $region68
        $region67: #{tpu_custom_call.1} parent=63 // pred_region
          %s576 = sand.u32 %s166, 1
          %s577 = scalar_lea.sflag [#allocation5], %s576
          %s578 = sand.u32 %s166, 1
          %s579 = smul.addr %s578, 16
          %s580 = scalar_lea.vmem [#allocation9], %s579
          %581 = dma.done %s577, 256
        $region68: #{tpu_custom_call.1} parent=63 // pred_fallthru
          _
      $region64: #{tpu_custom_call.1} parent=5 // pred_fallthru
        _
    $region6: #{tpu_custom_call.1} parent=1 // loop_footer
      %s22 = sadd.s32 1, %s18
    $region7: #{tpu_custom_call.1} parent=1 // loop_footer_branch
      %17 = sbr.rel target = $region3
    $region8: #{tpu_custom_call.1} parent=1 // loop_exit
      _
    %582 = vsyncpa [#allocation4], 1
    %s583 = scalar_lea.sflag [#allocation4], 1
    %584 = vsyncpa %s583, 1
    %585 = vsyncpa [#allocation7], 1
    %586 = vsyncpa [#allocation5], 1
    %s587 = scalar_lea.sflag [#allocation5], 1
    %588 = vsyncpa %s587, 1

</llo_original>
